<compile_context>
chip_gen: v7x
topology: tpu7x:2x2x1
jax: 0.10.0
libtpu: 0.0.40
codegen_flags: <defaults>
</compile_context>

<pallas_src>
import math
import functools

import jax
import jax.numpy as jnp
from jax.experimental import pallas as pl
from jax.experimental.pallas import tpu as pltpu


def _layernorm_kernel(params_ref, x_ref, o_ref, *, eps, d):
    """One grid point = one tile of rows.

    params_ref : (2,) f32 in SMEM  -> [alpha, bias] (scalar learnable params)
    x_ref/o_ref: (block_rows, D) tiles, D kept whole on the lane axis.
    """
    xf = x_ref[...].astype(jnp.float32)                       # (R, D)

    inv_d = jnp.float32(1.0 / d)
    # TODO(synk): d == 1 gives NaN in torch (Bessel 0/0); we clamp the divisor.
    inv_dm1 = jnp.float32(1.0 / max(d - 1, 1))

    # One-pass statistics: a single sweep over the tile.
    s = jnp.sum(xf, axis=-1, keepdims=True)                   # (R, 1)
    sq = jnp.sum(xf * xf, axis=-1, keepdims=True)             # (R, 1)
    mean = s * inv_d
    var = (sq - s * mean) * inv_dm1
    var = jnp.maximum(var, jnp.float32(0.0))                  # guard cancellation
    denom = jnp.sqrt(var) + jnp.float32(eps)                  # std + eps, (R, 1)

    # Per-row reciprocal on the EUP (approx ~2^-12) + one Newton step -> ~f32.
    inv = pl.reciprocal(denom, approx=True)
    inv = inv * (jnp.float32(2.0) - denom * inv)

    alpha = params_ref[0]
    bias = params_ref[1]
    scale = alpha * inv                                       # (R, 1)
    offset = bias - mean * scale                              # (R, 1)

    # Elementwise path is a single mul+add per element, lane-dense store.
    o_ref[...] = (xf * scale + offset).astype(o_ref.dtype)


def _pick_block_rows(rows, d, itemsize):
    """Row-tile size: sublane-aligned for the input dtype, one f32 block
    capped at ~2 MiB (fits v5e's 16 MiB scoped VMEM with double buffering),
    and >= 2 grid steps whenever rows permit (v7x megacore)."""
    sub = {1: 32, 2: 16}.get(itemsize, 8)
    if rows <= sub:
        return rows                      # block == full array dim: always legal
    max_bytes = 2 * 1024 * 1024          # per f32 input block
    cap = max(sub, (max_bytes // (d * 4)) // sub * sub)
    target = -(-rows // 2)               # cdiv(rows, 2): at least 2 grid steps
    target = -(-target // sub) * sub     # round up to sublane multiple
    return min(cap, target)


def layer_norm(x, alpha, bias, *, eps=1e-6):
    """x: (..., D); alpha, bias: scalar parameters (shape (1,) like nn.Parameter)."""
    orig_shape = x.shape
    D = orig_shape[-1]
    rows = math.prod(orig_shape[:-1]) if len(orig_shape) > 1 else 1
    x2 = x.reshape(rows, D)

    block_rows = _pick_block_rows(rows, D, x2.dtype.itemsize)
    grid = (pl.cdiv(rows, block_rows),)  # partial last tile is masked on store

    # Pack the scalar learnable params for SMEM scalar prefetch.
    params = jnp.stack([jnp.asarray(alpha, jnp.float32).reshape(()),
                        jnp.asarray(bias, jnp.float32).reshape(())])

    kernel = functools.partial(_layernorm_kernel, eps=float(eps), d=D)

    # Explicit VMEM budget: 2x double-buffered (in + out) + f32 temporaries.
    io_bytes = block_rows * D * x2.dtype.itemsize
    f32_tmp = block_rows * D * 4
    vmem_limit = int(min(max(2 * (io_bytes + io_bytes) + 3 * f32_tmp + (4 << 20),
                             16 << 20), 48 << 20))

    out = pl.pallas_call(
        kernel,
        out_shape=jax.ShapeDtypeStruct((rows, D), x.dtype),
        grid_spec=pltpu.PrefetchScalarGridSpec(
            num_scalar_prefetch=1,
            grid=grid,
            in_specs=[
                pl.BlockSpec((block_rows, D), lambda i, params: (i, 0)),  # x tile
            ],
            out_specs=pl.BlockSpec((block_rows, D), lambda i, params: (i, 0)),
        ),
        compiler_params=pltpu.CompilerParams(
            dimension_semantics=("parallel",),
            vmem_limit_bytes=vmem_limit),
    )(params, x2)

    return out.reshape(orig_shape)


def _reference_layernorm(x, alpha, bias, eps):
    """Pure-JAX reference mirroring the PyTorch forward."""
    mean = jnp.mean(x, axis=-1, keepdims=True)
    std = jnp.std(x, axis=-1, keepdims=True, ddof=1)   # Bessel, like torch.std
    return alpha * (x - mean) / (std + eps) + bias


if __name__ == "__main__":
    # Small, lane-dense demo shape: (batch=2, seq=8, hidden=128)
    # -> rows=16, block_rows=8, grid=(2,) so both v7x TensorCores get work.
    B, S, D = 2, 8, 128
    eps = 1e-6

    key = jax.random.PRNGKey(0)
    kx, ka, kb = jax.random.split(key, 3)

    x = jax.random.normal(kx, (B, S, D), dtype=jnp.float32)
    # Learnable scalar parameters (module inits to 1 / 0; use non-trivial
    # deterministic values so the scale and shift paths are exercised).
    alpha = jax.random.normal(ka, (1,), dtype=jnp.float32)
    bias = jax.random.normal(kb, (1,), dtype=jnp.float32)

    out = layer_norm(x, alpha, bias, eps=eps)
    out = jax.block_until_ready(out)

    ref = _reference_layernorm(x, alpha, bias, eps)
    assert out.shape == x.shape
    assert jnp.allclose(out, ref, atol=1e-4, rtol=1e-4), "mismatch vs JAX reference"

    print("KERNEL_OK")
</pallas_src>

<mosaic_0001>
module attributes {stable_mosaic.version = 11 : i64} {
  func.func @_layernorm_kernel(%arg0: i32, %arg1: memref<2xf32, #tpu.memory_space<smem>>, %arg2: memref<8x128xf32, #tpu.memory_space<vmem>>, %arg3: memref<8x128xf32, #tpu.memory_space<vmem>>) attributes {dimension_semantics = [#tpu.dimension_semantics<parallel>], iteration_bounds = array<i64: 2>, scalar_prefetch = 1 : i64, scratch_operands = 0 : i64, tpu.core_type = #tpu.core_type<tc>, window_params = [{transform_indices = @transform_0, window_bounds = array<i64: 8, 128>}, {transform_indices = @transform_1, window_bounds = array<i64: 8, 128>}]} {
    %c0 = arith.constant 0 : index
    %c0_0 = arith.constant 0 : index
    %0 = vector.load %arg2[%c0, %c0_0] : memref<8x128xf32, #tpu.memory_space<vmem>>, vector<8x128xf32>
    %cst = arith.constant dense<0.000000e+00> : vector<8xf32>
    %1 = vector.multi_reduction <add>, %0, %cst [1] : vector<8x128xf32> to vector<8xf32>
    %2 = vector.shape_cast %1 : vector<8xf32> to vector<8x1xf32>
    %3 = arith.mulf %0, %0 : vector<8x128xf32>
    %cst_1 = arith.constant dense<0.000000e+00> : vector<8xf32>
    %4 = vector.multi_reduction <add>, %3, %cst_1 [1] : vector<8x128xf32> to vector<8xf32>
    %5 = vector.shape_cast %4 : vector<8xf32> to vector<8x1xf32>
    %cst_2 = arith.constant 7.812500e-03 : f32
    %6 = vector.broadcast %cst_2 : f32 to vector<8x1xf32>
    %7 = arith.mulf %2, %6 : vector<8x1xf32>
    %8 = arith.mulf %2, %7 : vector<8x1xf32>
    %9 = arith.subf %5, %8 : vector<8x1xf32>
    %cst_3 = arith.constant 0.00787401571 : f32
    %10 = vector.broadcast %cst_3 : f32 to vector<8x1xf32>
    %11 = arith.mulf %9, %10 : vector<8x1xf32>
    %cst_4 = arith.constant 0.000000e+00 : f32
    %12 = vector.broadcast %cst_4 : f32 to vector<8x1xf32>
    %13 = arith.maximumf %11, %12 : vector<8x1xf32>
    %14 = math.sqrt %13 : vector<8x1xf32>
    %cst_5 = arith.constant 9.99999997E-7 : f32
    %15 = vector.broadcast %cst_5 : f32 to vector<8x1xf32>
    %16 = arith.addf %14, %15 : vector<8x1xf32>
    %17 = tpu.reciprocal %16 {approx = true} : vector<8x1xf32> -> vector<8x1xf32>
    %18 = arith.mulf %16, %17 : vector<8x1xf32>
    %cst_6 = arith.constant 2.000000e+00 : f32
    %19 = vector.broadcast %cst_6 : f32 to vector<8x1xf32>
    %20 = arith.subf %19, %18 : vector<8x1xf32>
    %21 = arith.mulf %17, %20 : vector<8x1xf32>
    %c0_7 = arith.constant 0 : index
    %22 = memref.load %arg1[%c0_7] : memref<2xf32, #tpu.memory_space<smem>>
    %c1 = arith.constant 1 : index
    %23 = memref.load %arg1[%c1] : memref<2xf32, #tpu.memory_space<smem>>
    %24 = vector.broadcast %22 : f32 to vector<8x1xf32>
    %25 = arith.mulf %24, %21 : vector<8x1xf32>
    %26 = arith.mulf %7, %25 : vector<8x1xf32>
    %27 = vector.broadcast %23 : f32 to vector<8x1xf32>
    %28 = arith.subf %27, %26 : vector<8x1xf32>
    %29 = vector.broadcast %25 : vector<8x1xf32> to vector<8x128xf32>
    %30 = arith.mulf %0, %29 : vector<8x128xf32>
    %31 = vector.broadcast %28 : vector<8x1xf32> to vector<8x128xf32>
    %32 = arith.addf %30, %31 : vector<8x128xf32>
    %c0_8 = arith.constant 0 : index
    %c0_9 = arith.constant 0 : index
    %33 = vector.load %arg3[%c0_8, %c0_9] : memref<8x128xf32, #tpu.memory_space<vmem>>, vector<8x128xf32>
    tpu.vector_store %arg3[%c0_8, %c0_9], %32 {strides = array<i32>} : memref<8x128xf32, #tpu.memory_space<vmem>>, vector<8x128xf32>,
    return
  }
  func.func @transform_0(%arg0: i32, %arg1: memref<2xf32, #tpu.memory_space<smem>>) -> (i32, i32) {
    %c0_i32 = arith.constant 0 : i32
    %c0_i32_0 = arith.constant 0 : i32
    return %arg0, %c0_i32 : i32, i32
  }
  func.func @transform_1(%arg0: i32, %arg1: memref<2xf32, #tpu.memory_space<smem>>) -> (i32, i32) {
    %c0_i32 = arith.constant 0 : i32
    %c0_i32_0 = arith.constant 0 : i32
    return %arg0, %c0_i32 : i32, i32
  }
}

</mosaic_0001>

<llo_original>
// kernel: tpu_custom_call.1
$region0: #{tpu_custom_call.1}
  #allocation0 [shape = 'u32[]', space=smem, size = 0x4, offset = 0x4, fixed_abs, tag = 'smem constant byte address 0x4 - core index']
  #allocation1 [shape = 'u32[144,128]{1,0:T(1,128)}', space=vmem, size = 0x12000, scoped, tag = 'internal scratch']
  #allocation2 [shape = 's32[1]{0}', space=sflag, size = 0x4, scoped, tag = 'scoped memory for tpu_custom_call.1']
  #allocation3 [shape = 'u8[512]{0}', space=smem, size = 0x200, scoped, tag = 'prefetched SMEM operand 0']
  %s0 = inlined_call_operand.hbm [shape: f32[2], index: 0, kind: input, shape index: {}]
  %s1 = inlined_call_operand.hbm [shape: f32[16,128], index: 1, kind: input, shape index: {}]
  %s2 = inlined_call_operand.hbm [shape: f32[16,128], index: 2, kind: output, shape index: {}]
  %s3 = sld [smem:[#allocation0]]
  $region41: #{tpu_custom_call.1} parent=0
    _
  %s5 = ssub.s32 1, %s3
  %s6 = scalar_select 0, %s5, %s3
  %8 = dma.hbm_to_smem %s0, 16, [#allocation3], [#allocation2]
  %9 = dma.done [#allocation2], 16
  %10 = sfence
  $region1: #{tpu_custom_call.1} parent=0
    #allocation4 [shape = 'u8[8192]{0}', space=vmem, size = 0x2000, scoped, tag = 'input window, operand 1']
    #allocation5 [shape = 's32[2]{0}', space=sflag, size = 0x8, scoped, tag = 'scoped memory for tpu_custom_call.1']
    #allocation6 [shape = 's32[2]{0}', space=sflag, size = 0x8, scoped, tag = 'scoped memory for tpu_custom_call.1']
    #allocation7 [shape = 'u8[8192]{0}', space=vmem, size = 0x2000, scoped, tag = 'output window, operand 0']
    %11 = vsyncpa [#allocation5], 0
    %s12 = scalar_lea.sflag [#allocation5], 1
    %13 = vsyncpa %s12, 0
    %14 = vsyncpa [#allocation6], 0
    %s15 = scalar_lea.sflag [#allocation6], 1
    %16 = vsyncpa %s15, 0
    loop: start=0, step=1, limit=4
    $region2: #{tpu_custom_call.1} parent=1 // loop_pre_header
      _
    $region3: #{tpu_custom_call.1} parent=1 // loop_header
      %s18 = sphi 0, %s22
      %p19 = scmp.ge.s32.totalorder %s18, 4
      %s28 = sphi 0, %s30
      %s31 = sphi 0, %s28
      %s32 = sphi 0, %s31
      %s48 = sphi 0, %s32
      %s54 = sphi 0, %s56
      %s57 = sphi 0, %s54
      %s58 = sphi 0, %s57
      %s74 = sphi 0, %s58
    $region4: #{tpu_custom_call.1} parent=1 // loop_header_branch
      %21 = sbr.rel (%p19) target = $region8
    $region5: #{tpu_custom_call.1} parent=1 // loop_body
      %s23 = ssub.s32 %s18, 1
      %s24 = ssub.s32 %s18, 2
      %s25 = sadd.s32 %s18, 1
      %s26 = ssub.s32 %s18, %s25
      %p27 = scmp.eq.s32.totalorder %s26, 0
      %s29 = sadd.s32 %s28, 1
      %s30 = scalar_select %p27, %s28, %s29
      %p33 = pneg %p27
      %p34 = scmp.eq.s32.totalorder %s18, 1
      %p35 = por %p33, %p34
      %p36 = scmp.ne.s32.totalorder %s28, %s31
      %p37 = scmp.eq.s32.totalorder %s18, 0
      %p38 = por %p36, %p37
      %p39 = scmp.ne.s32.totalorder %s28, %s31
      %p40 = scmp.eq.s32.totalorder %s23, 1
      %p41 = por %p39, %p40
      %p42 = scmp.ne.s32.totalorder %s31, %s32
      %p43 = scmp.eq.s32.totalorder %s23, 0
      %p44 = por %p42, %p43
      %p45 = scmp.ne.s32.totalorder %s31, %s32
      %p46 = scmp.eq.s32.totalorder %s24, 1
      %p47 = por %p45, %p46
      %p49 = scmp.ne.s32.totalorder %s32, %s48
      %p50 = scmp.eq.s32.totalorder %s24, 0
      %p51 = por %p49, %p50
      %s52 = ssub.s32 %s18, %s25
      %p53 = scmp.eq.s32.totalorder %s52, 0
      %s55 = sadd.s32 %s54, 1
      %s56 = scalar_select %p53, %s54, %s55
      %p59 = pneg %p53
      %p60 = scmp.eq.s32.totalorder %s18, 1
      %p61 = por %p59, %p60
      %p62 = scmp.ne.s32.totalorder %s54, %s57
      %p63 = scmp.eq.s32.totalorder %s18, 0
      %p64 = por %p62, %p63
      %p65 = scmp.ne.s32.totalorder %s54, %s57
      %p66 = scmp.eq.s32.totalorder %s23, 1
      %p67 = por %p65, %p66
      %p68 = scmp.ne.s32.totalorder %s57, %s58
      %p69 = scmp.eq.s32.totalorder %s23, 0
      %p70 = por %p68, %p69
      %p71 = scmp.ne.s32.totalorder %s57, %s58
      %p72 = scmp.eq.s32.totalorder %s24, 1
      %p73 = por %p71, %p72
      %p75 = scmp.ne.s32.totalorder %s58, %s74
      %p76 = scmp.eq.s32.totalorder %s24, 0
      %p77 = por %p75, %p76
      %p78 = scmp.le.s32.totalorder 1, %s18
      %p79 = scmp.lt.s32.totalorder %s18, 3
      %p80 = pnand %p78, %p79
      %p81 = pneg %p80
      // Predicated region
      $region9: #{tpu_custom_call.1} parent=5 // pred_check
        _
      $region10: #{tpu_custom_call.1} parent=5 // pred_check_branch
        %83 = sbr.rel (%p80) target = $region12
      $region11: #{tpu_custom_call.1} parent=5 // pred_region
        %s84 = ssub.s32 %s18, 1
      $region12: #{tpu_custom_call.1} parent=5 // pred_fallthru
        _
      %p85 = scmp.lt.s32.totalorder %s18, 2
      // Predicated region
      $region13: #{tpu_custom_call.1} parent=5 // pred_check
        %p86 = pneg %p85
      $region14: #{tpu_custom_call.1} parent=5 // pred_check_branch
        %88 = sbr.rel (%p86) target = $region16
      $region15: #{tpu_custom_call.1} parent=5 // pred_region
        // Predicated region
        $region17: #{tpu_custom_call.1} parent=15 // pred_check
          %p89 = pneg %p38
        $region18: #{tpu_custom_call.1} parent=15 // pred_check_branch
          %91 = sbr.rel (%p89) target = $region20
        $region19: #{tpu_custom_call.1} parent=15 // pred_region
          %s92 = sand.u32 %s28, 1
          %s93 = scalar_lea.sflag [#allocation5], %s92
          %s94 = sand.u32 %s28, 1
          %s95 = smul.addr %s94, 8
          %s96 = scalar_lea.vmem [#allocation4], %s95
          %s98 = ssub.s32 128, 128
          %99 = vsyncadd %s93, %s98
          %s100 = smul.addr %s18, 128
          %s101 = scalar_lea.hbm %s1, %s100
          %s103 = sshll.u32 %s96, 4
          %s104 = int_to_ptr.vmem [resolvable:$true] %s103
          %106 = dma.hbm_to_vmem [thread:$0]  %s101, 128, %s104, %s93
        $region20: #{tpu_custom_call.1} parent=15 // pred_fallthru
          _
      $region16: #{tpu_custom_call.1} parent=5 // pred_fallthru
        _
      %p107 = scmp.le.s32.totalorder 1, %s18
      %p108 = scmp.lt.s32.totalorder %s18, 3
      %p109 = pnand %p107, %p108
      %p110 = pneg %p109
      // Predicated region
      $region21: #{tpu_custom_call.1} parent=5 // pred_check
        _
      $region22: #{tpu_custom_call.1} parent=5 // pred_check_branch
        %112 = sbr.rel (%p109) target = $region24
      $region23: #{tpu_custom_call.1} parent=5 // pred_region
        %s113 = ssub.s32 %s18, 1
        %s114 = sand.u32 %s31, 1
        %s115 = scalar_lea.sflag [#allocation5], %s114
        %s116 = sand.u32 %s31, 1
        %s117 = smul.addr %s116, 8
        %s118 = scalar_lea.vmem [#allocation4], %s117
        // Predicated region
        $region25: #{tpu_custom_call.1} parent=23 // pred_check
          %p119 = pneg %p44
        $region26: #{tpu_custom_call.1} parent=23 // pred_check_branch
          %121 = sbr.rel (%p119) target = $region28
        $region27: #{tpu_custom_call.1} parent=23 // pred_region
          %122 = dma.done %s115, 128
        $region28: #{tpu_custom_call.1} parent=23 // pred_fallthru
          _
        %s123 = sand.u32 %s31, 1
        %s124 = scalar_lea.sflag [#allocation5], %s123
        %s125 = sand.u32 %s31, 1
        %s126 = smul.addr %s125, 8
        %s127 = scalar_lea.vmem [#allocation4], %s126
        %p128 = pneg %p44
        %p129 = pneg %p41
        %p130 = pneg %p70
        %p131 = pneg %p67
        %s132 = sand.u32 %s57, 1
        %s133 = scalar_lea.sflag [#allocation6], %s132
        %s134 = sand.u32 %s57, 1
        %s135 = smul.addr %s134, 8
        %s136 = scalar_lea.vmem [#allocation7], %s135
        %v137 = vld [vmem:[%s118] sm:$0xff]
        %138 = vadd.xlane.f32.xlu0 %v137
        %v139 = vpop.xlane.xlu0 %138
        %v140 = vmul.f32 %v137, %v137
        %141 = vadd.xlane.f32.xlu0 %v140
        %v142 = vpop.xlane.xlu0 %141
        %v143 = vmul.f32 %v139, 0.0078125
        %v144 = vmul.f32 %v139, %v143
        %v145 = vsub.f32 %v142, %v144
        %v146 = vmul.f32 %v145, 0.007874016
        %v147 = vmax.f32 %v146, 0.0
        %v148 = vrsqrt.pop %v147
        %v149 = vmul.f32 %v147, %v148
        %vm150 = vcmp.eq.f32.partialorder %v147, inf
        %v151 = vsel %vm150, %v147, %v149
        %vm152 = vcmp.eq.f32.partialorder %v147, 0.0
        %v153 = vand.u32 %v147, 2147483648
        %v154 = vsel %vm152, %v153, %v151
        %v155 = vadd.f32 %v154, 1e-06
        %v156 = vrcp.pop %v155
        %v157 = vmul.f32 %v155, %v156
        %v158 = vsub.f32 2.0, %v157
        %v159 = vmul.f32 %v156, %v158
        %s160 = sld [smem:[#allocation3]]
        %s161 = sld [smem:[#allocation3 + $0x1]]
        %v162 = vstv %s160
        %v163 = vmul.f32 %v162, %v159
        %v164 = vmul.f32 %v143, %v163
        %v165 = vstv %s161
        %v166 = vsub.f32 %v165, %v164
        %v167 = vmul.f32 %v137, %v163
        %v168 = vadd.f32 %v167, %v166
        %169 = vst [vmem:[%s136] sm:$0xff] %v168
        %s170 = sand.u32 %s57, 1
        %s171 = scalar_lea.sflag [#allocation6], %s170
        %s172 = sand.u32 %s57, 1
        %s173 = smul.addr %s172, 8
        %s174 = scalar_lea.vmem [#allocation7], %s173
        // Predicated region
        $region29: #{tpu_custom_call.1} parent=23 // pred_check
          %p175 = pneg %p67
        $region30: #{tpu_custom_call.1} parent=23 // pred_check_branch
          %177 = sbr.rel (%p175) target = $region32
        $region31: #{tpu_custom_call.1} parent=23 // pred_region
          %s179 = ssub.s32 128, 128
          %180 = vsyncadd %s171, %s179
          %s181 = smul.addr %s23, 128
          %s182 = scalar_lea.hbm %s2, %s181
          %s184 = sshll.u32 %s174, 4
          %s185 = int_to_ptr.vmem [resolvable:$true] %s184
          %187 = dma.vmem_to_hbm [thread:$0]  %s185, 128, %s182, %s171
        $region32: #{tpu_custom_call.1} parent=23 // pred_fallthru
          _
      $region24: #{tpu_custom_call.1} parent=5 // pred_fallthru
        _
      %p188 = scmp.le.s32.totalorder 2, %s18
      // Predicated region
      $region33: #{tpu_custom_call.1} parent=5 // pred_check
        %p189 = pneg %p188
      $region34: #{tpu_custom_call.1} parent=5 // pred_check_branch
        %191 = sbr.rel (%p189) target = $region36
      $region35: #{tpu_custom_call.1} parent=5 // pred_region
        %s192 = ssub.s32 %s18, 2
        // Predicated region
        $region37: #{tpu_custom_call.1} parent=35 // pred_check
          %p193 = pneg %p73
        $region38: #{tpu_custom_call.1} parent=35 // pred_check_branch
          %195 = sbr.rel (%p193) target = $region40
        $region39: #{tpu_custom_call.1} parent=35 // pred_region
          %s196 = sand.u32 %s58, 1
          %s197 = scalar_lea.sflag [#allocation6], %s196
          %s198 = sand.u32 %s58, 1
          %s199 = smul.addr %s198, 8
          %s200 = scalar_lea.vmem [#allocation7], %s199
          %201 = dma.done %s197, 128
        $region40: #{tpu_custom_call.1} parent=35 // pred_fallthru
          _
      $region36: #{tpu_custom_call.1} parent=5 // pred_fallthru
        _
    $region6: #{tpu_custom_call.1} parent=1 // loop_footer
      %s22 = sadd.s32 1, %s18
    $region7: #{tpu_custom_call.1} parent=1 // loop_footer_branch
      %17 = sbr.rel target = $region3
    $region8: #{tpu_custom_call.1} parent=1 // loop_exit
      _
    %202 = vsyncpa [#allocation5], 1
    %s203 = scalar_lea.sflag [#allocation5], 1
    %204 = vsyncpa %s203, 1
    %205 = vsyncpa [#allocation6], 1
    %s206 = scalar_lea.sflag [#allocation6], 1
    %207 = vsyncpa %s206, 1

</llo_original>
